<compile_context>
chip_gen: v7x
topology: tpu7x:2x2x1
jax: 0.10.0
libtpu: 0.0.40
codegen_flags: <defaults>
</compile_context>

<pallas_src>
import math

import jax
import jax.numpy as jnp
from jax.experimental import pallas as pl
from jax.experimental.pallas import tpu as pltpu

WINDOW_SIZE = 11
SIGMA = 1.5
C1 = 0.01 ** 2
C2 = 0.03 ** 2


def _gaussian_1d(window_size=WINDOW_SIZE, sigma=SIGMA):
    """Normalized 1D gaussian (same as PyTorch LpLssimLoss.gaussian)."""
    g = [math.exp(-((x - window_size // 2) ** 2) / (2.0 * sigma ** 2))
         for x in range(window_size)]
    s = sum(g)
    return [v / s for v in g]


_GAUSS_1D = _gaussian_1d()
# 2D window only needed by the pure-JAX reference below.
_WINDOW_2D = [[_GAUSS_1D[i] * _GAUSS_1D[j] for j in range(WINDOW_SIZE)]
              for i in range(WINDOW_SIZE)]


def _band_matrix(n, g):
    """Banded (n, n) matrix M with M[i, j] = g[j - i + half], 0 outside the band.

    M @ img is the zero-padded (pad = half) 1D gaussian conv along rows;
    img @ M is the same along columns (M is symmetric since g is symmetric).
    Reproduces F.conv2d(..., padding=window_size // 2) exactly with no padded
    copies.
    """
    half = len(g) // 2
    idx = jnp.arange(n)
    d = idx[None, :] - idx[:, None] + half            # j - i + half
    gv = jnp.asarray(g, jnp.float32)
    valid = (d >= 0) & (d < len(g))
    return jnp.where(valid, gv[jnp.clip(d, 0, len(g) - 1)],
                     jnp.float32(0.0)).astype(jnp.float32)


def _choose_channel_block(c, h, w):
    """Largest channel block TC (divisor of C) whose lane-stacked width is a legal
    block (TC == C, or TC*W a multiple of 128) with a modest VMEM working set."""
    best = c  # TC == C always satisfies the (8, 128) block-shape rule
    budget = 24 * 1024 * 1024
    for tc in range(1, c + 1):
        if c % tc:
            continue
        lanes = tc * w
        if tc != c and lanes % 128 != 0:
            continue
        if lanes > 1024:                       # keep the block-diag G_col small
            continue
        est = 4 * (18 * h * lanes + 2 * h * h + 2 * lanes * lanes)
        if est > budget:
            continue
        best = tc
    return best


def _lssim_kernel(x_ref, y_ref, gr_ref, gc_ref, o_ref, acc_ref):
    """One grid step: a lane-dense (H, TC*W) stacked channel block of each image.

    Five gaussian "convolutions" run as banded matmuls on the MXU; the VPU only
    builds the pointwise SSIM map.  Partial sums accumulate in a VMEM scratch
    across the channel axis; the per-batch output block is written on the last
    channel step only.
    """
    j = pl.program_id(1)

    @pl.when(j == 0)
    def _init():
        acc_ref[...] = jnp.zeros_like(acc_ref)

    x = x_ref[...].astype(jnp.float32)       # (H, TC*W)
    y = y_ref[...].astype(jnp.float32)       # (H, TC*W)
    g_row = gr_ref[...]                      # (H, H) banded gaussian (rows)
    g_cb = gc_ref[...]                       # (TC*W, TC*W) block-diag col gaussian

    def gconv(p):
        t = jnp.dot(g_row, p, preferred_element_type=jnp.float32)
        return jnp.dot(t, g_cb, preferred_element_type=jnp.float32)

    mu1 = gconv(x)
    mu2 = gconv(y)
    mu1_mu2 = mu1 * mu2
    mu1_sq = mu1 * mu1
    mu2_sq = mu2 * mu2
    # Consume each second-moment conv immediately (short live ranges).
    sigma1_sq = gconv(x * x) - mu1_sq
    sigma2_sq = gconv(y * y) - mu2_sq
    sigma12 = gconv(x * y) - mu1_mu2

    num = (2.0 * mu1_mu2 + C1) * (2.0 * sigma12 + C2)
    den = (mu1_sq + mu2_sq + C1) * (sigma1_sq + sigma2_sq + C2)
    # EUP approximate reciprocal + one Newton-Raphson step (well inside 1e-4).
    r0 = pl.reciprocal(den, approx=True)
    inv_den = r0 * (2.0 - den * r0)
    ssim_map = num * inv_den

    acc_ref[...] += jnp.sum(ssim_map)

    @pl.when(j == pl.num_programs(1) - 1)
    def _finalize():
        o_ref[...] = acc_ref[...]


def lp_lssim_loss(image_in, image_out, window_size=WINDOW_SIZE):
    """Pallas implementation of LpLssimLoss.forward (size_average=True)."""
    assert image_in.shape == image_out.shape
    B, C, H, W = image_in.shape
    g = _gaussian_1d(window_size)

    tc = _choose_channel_block(C, H, W)
    n_cb = C // tc
    lanes = tc * W

    g_row = _band_matrix(H, g)                                  # (H, H)
    g_col = _band_matrix(W, g)                                  # (W, W), symmetric
    g_col_block = jnp.kron(jnp.eye(tc, dtype=jnp.float32), g_col)  # (TC*W, TC*W)

    # Stack channels along lanes: x_s[b, i, c*W + w] = image[b, c, i, w].
    x_s = jnp.transpose(image_in.astype(jnp.float32), (0, 2, 1, 3)).reshape(B, H, C * W)
    y_s = jnp.transpose(image_out.astype(jnp.float32), (0, 2, 1, 3)).reshape(B, H, C * W)

    out = pl.pallas_call(
        _lssim_kernel,
        out_shape=jax.ShapeDtypeStruct((B, 8, 128), jnp.float32),
        grid_spec=pltpu.PrefetchScalarGridSpec(
            num_scalar_prefetch=0,
            grid=(B, n_cb),
            in_specs=[
                pl.BlockSpec((None, H, lanes), lambda b, j: (b, 0, j)),
                pl.BlockSpec((None, H, lanes), lambda b, j: (b, 0, j)),
                pl.BlockSpec((H, H), lambda b, j: (0, 0)),          # resident const
                pl.BlockSpec((lanes, lanes), lambda b, j: (0, 0)),  # resident const
            ],
            out_specs=pl.BlockSpec((None, 8, 128), lambda b, j: (b, 0, 0)),
            scratch_shapes=[pltpu.VMEM((8, 128), jnp.float32)],
        ),
        compiler_params=pltpu.CompilerParams(
            dimension_semantics=("parallel", "arbitrary")),
    )(x_s, y_s, g_row, g_col_block)

    partials = out[:, 0, 0]                       # per-batch SSIM sums
    total = jnp.float32(B * C * H * W)
    return jnp.float32(1.0) - jnp.sum(partials) / total


def _reference_loss(image_in, image_out, window_size=WINDOW_SIZE):
    """Pure-JAX reference (direct translation of the PyTorch module)."""
    B, C, H, W = image_in.shape
    p = window_size // 2
    x = jnp.pad(image_in.astype(jnp.float32), ((0, 0), (0, 0), (p, p), (p, p)))
    y = jnp.pad(image_out.astype(jnp.float32), ((0, 0), (0, 0), (p, p), (p, p)))
    w2d = jnp.asarray(_WINDOW_2D, jnp.float32)

    def conv(a):
        out = jnp.zeros((B, C, H, W), jnp.float32)
        for dy in range(window_size):
            for dx in range(window_size):
                out = out + w2d[dy, dx] * a[:, :, dy:dy + H, dx:dx + W]
        return out

    mu1, mu2 = conv(x), conv(y)
    sxx, syy, sxy = conv(x * x), conv(y * y), conv(x * y)
    mu1_sq, mu2_sq, mu1_mu2 = mu1 * mu1, mu2 * mu2, mu1 * mu2
    sigma1_sq = sxx - mu1_sq
    sigma2_sq = syy - mu2_sq
    sigma12 = sxy - mu1_mu2
    ssim_map = ((2.0 * mu1_mu2 + C1) * (2.0 * sigma12 + C2)) / (
        (mu1_sq + mu2_sq + C1) * (sigma1_sq + sigma2_sq + C2))
    return 1.0 - ssim_map.mean()


if __name__ == "__main__":
    key = jax.random.PRNGKey(0)
    k1, k2 = jax.random.split(key)
    B, C, H, W = 2, 4, 16, 16
    image_in = jax.random.uniform(k1, (B, C, H, W), dtype=jnp.float32)
    image_out = jax.random.uniform(k2, (B, C, H, W), dtype=jnp.float32)

    loss = lp_lssim_loss(image_in, image_out)
    loss = jax.block_until_ready(loss)

    ref = _reference_loss(image_in, image_out)
    assert jnp.allclose(loss, ref, atol=1e-4, rtol=1e-4), (loss, ref)

    print("KERNEL_OK")
</pallas_src>

<mosaic_0001>
module attributes {stable_mosaic.version = 11 : i64} {
  func.func @_lssim_kernel(%arg0: i32, %arg1: i32, %arg2: memref<1x16x64xf32, #tpu.memory_space<vmem>>, %arg3: memref<1x16x64xf32, #tpu.memory_space<vmem>>, %arg4: memref<16x16xf32, #tpu.memory_space<vmem>>, %arg5: memref<64x64xf32, #tpu.memory_space<vmem>>, %arg6: memref<1x8x128xf32, #tpu.memory_space<vmem>>, %arg7: memref<8x128xf32, #tpu.memory_space<vmem>>) attributes {dimension_semantics = [#tpu.dimension_semantics<parallel>, #tpu.dimension_semantics<arbitrary>], iteration_bounds = array<i64: 2, 1>, scalar_prefetch = 0 : i64, scratch_operands = 1 : i64, tpu.core_type = #tpu.core_type<tc>, window_params = [{transform_indices = @transform_0, window_bounds = array<i64: 1, 16, 64>}, {transform_indices = @transform_1, window_bounds = array<i64: 1, 16, 64>}, {pipeline_mode = #tpu.pipeline_mode<synchronous>, transform_indices = @transform_2, window_bounds = array<i64: 16, 16>}, {pipeline_mode = #tpu.pipeline_mode<synchronous>, transform_indices = @transform_3, window_bounds = array<i64: 64, 64>}, {transform_indices = @transform_4, window_bounds = array<i64: 1, 8, 128>}]} {
    %c0_i32 = arith.constant 0 : i32
    %0 = arith.cmpi eq, %arg1, %c0_i32 : i32
    %1 = arith.extui %0 : i1 to i32
    %c0_i32_0 = arith.constant 0 : i32
    %2 = arith.cmpi ne, %1, %c0_i32_0 : i32
    scf.if %2 {
      %cst_33 = arith.constant 0.000000e+00 : f32
      %61 = vector.broadcast %cst_33 : f32 to vector<8x128xf32>
      %c0_34 = arith.constant 0 : index
      %c0_35 = arith.constant 0 : index
      %62 = vector.load %arg7[%c0_34, %c0_35] : memref<8x128xf32, #tpu.memory_space<vmem>>, vector<8x128xf32>
      tpu.vector_store %arg7[%c0_34, %c0_35], %61 {strides = array<i32>} : memref<8x128xf32, #tpu.memory_space<vmem>>, vector<8x128xf32>,
    } else {
    }
    %c0 = arith.constant 0 : index
    %c0_1 = arith.constant 0 : index
    %c0_2 = arith.constant 0 : index
    %3 = vector.load %arg2[%c0, %c0_1, %c0_2] : memref<1x16x64xf32, #tpu.memory_space<vmem>>, vector<1x16x64xf32>
    %4 = vector.shape_cast %3 : vector<1x16x64xf32> to vector<16x64xf32>
    %c0_3 = arith.constant 0 : index
    %c0_4 = arith.constant 0 : index
    %c0_5 = arith.constant 0 : index
    %5 = vector.load %arg3[%c0_3, %c0_4, %c0_5] : memref<1x16x64xf32, #tpu.memory_space<vmem>>, vector<1x16x64xf32>
    %6 = vector.shape_cast %5 : vector<1x16x64xf32> to vector<16x64xf32>
    %c0_6 = arith.constant 0 : index
    %c0_7 = arith.constant 0 : index
    %7 = vector.load %arg4[%c0_6, %c0_7] : memref<16x16xf32, #tpu.memory_space<vmem>>, vector<16x16xf32>
    %c0_8 = arith.constant 0 : index
    %c0_9 = arith.constant 0 : index
    %8 = vector.load %arg5[%c0_8, %c0_9] : memref<64x64xf32, #tpu.memory_space<vmem>>, vector<64x64xf32>
    %cst = arith.constant dense<0.000000e+00> : vector<16x64xf32>
    %9 = tpu.matmul %7, %4, %cst {dimension_numbers = #tpu.dot_dimension_numbers<[1], [0], [0], [1], [0, 0, 1, 1], [], []>} : vector<16x16xf32>, vector<16x64xf32>, vector<16x64xf32> -> vector<16x64xf32>
    %cst_10 = arith.constant dense<0.000000e+00> : vector<16x64xf32>
    %10 = tpu.matmul %9, %8, %cst_10 {dimension_numbers = #tpu.dot_dimension_numbers<[1], [0], [0], [1], [0, 0, 1, 1], [], []>} : vector<16x64xf32>, vector<64x64xf32>, vector<16x64xf32> -> vector<16x64xf32>
    %cst_11 = arith.constant dense<0.000000e+00> : vector<16x64xf32>
    %11 = tpu.matmul %7, %6, %cst_11 {dimension_numbers = #tpu.dot_dimension_numbers<[1], [0], [0], [1], [0, 0, 1, 1], [], []>} : vector<16x16xf32>, vector<16x64xf32>, vector<16x64xf32> -> vector<16x64xf32>
    %cst_12 = arith.constant dense<0.000000e+00> : vector<16x64xf32>
    %12 = tpu.matmul %11, %8, %cst_12 {dimension_numbers = #tpu.dot_dimension_numbers<[1], [0], [0], [1], [0, 0, 1, 1], [], []>} : vector<16x64xf32>, vector<64x64xf32>, vector<16x64xf32> -> vector<16x64xf32>
    %13 = arith.mulf %10, %12 : vector<16x64xf32>
    %14 = arith.mulf %10, %10 : vector<16x64xf32>
    %15 = arith.mulf %12, %12 : vector<16x64xf32>
    %16 = arith.mulf %4, %4 : vector<16x64xf32>
    %cst_13 = arith.constant dense<0.000000e+00> : vector<16x64xf32>
    %17 = tpu.matmul %7, %16, %cst_13 {dimension_numbers = #tpu.dot_dimension_numbers<[1], [0], [0], [1], [0, 0, 1, 1], [], []>} : vector<16x16xf32>, vector<16x64xf32>, vector<16x64xf32> -> vector<16x64xf32>
    %cst_14 = arith.constant dense<0.000000e+00> : vector<16x64xf32>
    %18 = tpu.matmul %17, %8, %cst_14 {dimension_numbers = #tpu.dot_dimension_numbers<[1], [0], [0], [1], [0, 0, 1, 1], [], []>} : vector<16x64xf32>, vector<64x64xf32>, vector<16x64xf32> -> vector<16x64xf32>
    %19 = arith.subf %18, %14 : vector<16x64xf32>
    %20 = arith.mulf %6, %6 : vector<16x64xf32>
    %cst_15 = arith.constant dense<0.000000e+00> : vector<16x64xf32>
    %21 = tpu.matmul %7, %20, %cst_15 {dimension_numbers = #tpu.dot_dimension_numbers<[1], [0], [0], [1], [0, 0, 1, 1], [], []>} : vector<16x16xf32>, vector<16x64xf32>, vector<16x64xf32> -> vector<16x64xf32>
    %cst_16 = arith.constant dense<0.000000e+00> : vector<16x64xf32>
    %22 = tpu.matmul %21, %8, %cst_16 {dimension_numbers = #tpu.dot_dimension_numbers<[1], [0], [0], [1], [0, 0, 1, 1], [], []>} : vector<16x64xf32>, vector<64x64xf32>, vector<16x64xf32> -> vector<16x64xf32>
    %23 = arith.subf %22, %15 : vector<16x64xf32>
    %24 = arith.mulf %4, %6 : vector<16x64xf32>
    %cst_17 = arith.constant dense<0.000000e+00> : vector<16x64xf32>
    %25 = tpu.matmul %7, %24, %cst_17 {dimension_numbers = #tpu.dot_dimension_numbers<[1], [0], [0], [1], [0, 0, 1, 1], [], []>} : vector<16x16xf32>, vector<16x64xf32>, vector<16x64xf32> -> vector<16x64xf32>
    %cst_18 = arith.constant dense<0.000000e+00> : vector<16x64xf32>
    %26 = tpu.matmul %25, %8, %cst_18 {dimension_numbers = #tpu.dot_dimension_numbers<[1], [0], [0], [1], [0, 0, 1, 1], [], []>} : vector<16x64xf32>, vector<64x64xf32>, vector<16x64xf32> -> vector<16x64xf32>
    %27 = arith.subf %26, %13 : vector<16x64xf32>
    %cst_19 = arith.constant 2.000000e+00 : f32
    %28 = vector.broadcast %cst_19 : f32 to vector<16x64xf32>
    %29 = arith.mulf %28, %13 : vector<16x64xf32>
    %cst_20 = arith.constant 9.99999974E-5 : f32
    %30 = vector.broadcast %cst_20 : f32 to vector<16x64xf32>
    %31 = arith.addf %29, %30 : vector<16x64xf32>
    %cst_21 = arith.constant 2.000000e+00 : f32
    %32 = vector.broadcast %cst_21 : f32 to vector<16x64xf32>
    %33 = arith.mulf %32, %27 : vector<16x64xf32>
    %cst_22 = arith.constant 8.99999984E-4 : f32
    %34 = vector.broadcast %cst_22 : f32 to vector<16x64xf32>
    %35 = arith.addf %33, %34 : vector<16x64xf32>
    %36 = arith.mulf %31, %35 : vector<16x64xf32>
    %37 = arith.addf %14, %15 : vector<16x64xf32>
    %cst_23 = arith.constant 9.99999974E-5 : f32
    %38 = vector.broadcast %cst_23 : f32 to vector<16x64xf32>
    %39 = arith.addf %37, %38 : vector<16x64xf32>
    %40 = arith.addf %19, %23 : vector<16x64xf32>
    %cst_24 = arith.constant 8.99999984E-4 : f32
    %41 = vector.broadcast %cst_24 : f32 to vector<16x64xf32>
    %42 = arith.addf %40, %41 : vector<16x64xf32>
    %43 = arith.mulf %39, %42 : vector<16x64xf32>
    %44 = tpu.reciprocal %43 {approx = true} : vector<16x64xf32> -> vector<16x64xf32>
    %45 = arith.mulf %43, %44 : vector<16x64xf32>
    %cst_25 = arith.constant 2.000000e+00 : f32
    %46 = vector.broadcast %cst_25 : f32 to vector<16x64xf32>
    %47 = arith.subf %46, %45 : vector<16x64xf32>
    %48 = arith.mulf %44, %47 : vector<16x64xf32>
    %49 = arith.mulf %36, %48 : vector<16x64xf32>
    %c0_26 = arith.constant 0 : index
    %c0_27 = arith.constant 0 : index
    %50 = vector.load %arg7[%c0_26, %c0_27] : memref<8x128xf32, #tpu.memory_space<vmem>>, vector<8x128xf32>
    %51 = vector.shape_cast %49 : vector<16x64xf32> to vector<1x16x64xf32>
    %cst_28 = arith.constant dense<0.000000e+00> : vector<1xf32>
    %52 = vector.multi_reduction <add>, %51, %cst_28 [1, 2] : vector<1x16x64xf32> to vector<1xf32>
    %53 = vector.shape_cast %52 : vector<1xf32> to vector<1x1x1xf32>
    %54 = vector.extract %53[0, 0, 0] : f32 from vector<1x1x1xf32>
    %55 = vector.broadcast %54 : f32 to vector<8x128xf32>
    %56 = arith.addf %50, %55 : vector<8x128xf32>
    %c0_29 = arith.constant 0 : index
    %c0_30 = arith.constant 0 : index
    %57 = vector.load %arg7[%c0_29, %c0_30] : memref<8x128xf32, #tpu.memory_space<vmem>>, vector<8x128xf32>
    tpu.vector_store %arg7[%c0_29, %c0_30], %56 {strides = array<i32>} : memref<8x128xf32, #tpu.memory_space<vmem>>, vector<8x128xf32>,
    %c0_i32_31 = arith.constant 0 : i32
    %58 = arith.cmpi eq, %arg1, %c0_i32_31 : i32
    %59 = arith.extui %58 : i1 to i32
    %c0_i32_32 = arith.constant 0 : i32
    %60 = arith.cmpi ne, %59, %c0_i32_32 : i32
    scf.if %60 {
      %c0_33 = arith.constant 0 : index
      %c0_34 = arith.constant 0 : index
      %61 = vector.load %arg7[%c0_33, %c0_34] : memref<8x128xf32, #tpu.memory_space<vmem>>, vector<8x128xf32>
      %c0_35 = arith.constant 0 : index
      %c0_36 = arith.constant 0 : index
      %c0_37 = arith.constant 0 : index
      %62 = vector.load %arg6[%c0_35, %c0_36, %c0_37] : memref<1x8x128xf32, #tpu.memory_space<vmem>>, vector<1x8x128xf32>
      %63 = vector.shape_cast %62 : vector<1x8x128xf32> to vector<8x128xf32>
      %64 = vector.shape_cast %61 : vector<8x128xf32> to vector<1x8x128xf32>
      tpu.vector_store %arg6[%c0_35, %c0_36, %c0_37], %64 {strides = array<i32>} : memref<1x8x128xf32, #tpu.memory_space<vmem>>, vector<1x8x128xf32>,
    } else {
    }
    return
  }
  func.func @transform_0(%arg0: i32, %arg1: i32) -> (i32, i32, i32) {
    %c0_i32 = arith.constant 0 : i32
    %c0_i32_0 = arith.constant 0 : i32
    return %arg0, %c0_i32, %arg1 : i32, i32, i32
  }
  func.func @transform_1(%arg0: i32, %arg1: i32) -> (i32, i32, i32) {
    %c0_i32 = arith.constant 0 : i32
    %c0_i32_0 = arith.constant 0 : i32
    return %arg0, %c0_i32, %arg1 : i32, i32, i32
  }
  func.func @transform_2(%arg0: i32, %arg1: i32) -> (i32, i32) {
    %c0_i32 = arith.constant 0 : i32
    %c0_i32_0 = arith.constant 0 : i32
    %c0_i32_1 = arith.constant 0 : i32
    return %c0_i32, %c0_i32_0 : i32, i32
  }
  func.func @transform_3(%arg0: i32, %arg1: i32) -> (i32, i32) {
    %c0_i32 = arith.constant 0 : i32
    %c0_i32_0 = arith.constant 0 : i32
    %c0_i32_1 = arith.constant 0 : i32
    return %c0_i32, %c0_i32_0 : i32, i32
  }
  func.func @transform_4(%arg0: i32, %arg1: i32) -> (i32, i32, i32) {
    %c0_i32 = arith.constant 0 : i32
    %c0_i32_0 = arith.constant 0 : i32
    %c0_i32_1 = arith.constant 0 : i32
    return %arg0, %c0_i32, %c0_i32_0 : i32, i32, i32
  }
}

</mosaic_0001>

<llo_original>
// kernel: tpu_custom_call.1
$region0: #{tpu_custom_call.1}
  #allocation0 [shape = 'u32[]', space=smem, size = 0x4, offset = 0x4, fixed_abs, tag = 'smem constant byte address 0x4 - core index']
  #allocation1 [shape = 'u32[144,128]{1,0:T(1,128)}', space=vmem, size = 0x12000, scoped, tag = 'internal scratch']
  #allocation2 [shape = 'f32[8,128]{1,0:T(8,128)}', space=vmem, size = 0x1000, scoped, tag = 'scratch operand']
  %s0 = inlined_call_operand.hbm [shape: f32[2,16,64], index: 0, kind: input, shape index: {}]
  %s1 = inlined_call_operand.hbm [shape: f32[2,16,64], index: 1, kind: input, shape index: {}]
  %s2 = inlined_call_operand.hbm [shape: f32[16,16], index: 2, kind: input, shape index: {}]
  %s3 = inlined_call_operand.hbm [shape: f32[64,64], index: 3, kind: input, shape index: {}]
  %s4 = inlined_call_operand.hbm [shape: f32[2,8,128], index: 4, kind: output, shape index: {}]
  %s5 = sld [smem:[#allocation0]]
  $region73: #{tpu_custom_call.1} parent=0
    _
  %s7 = ssub.s32 1, %s5
  %s8 = scalar_select 0, %s7, %s5
  $region1: #{tpu_custom_call.1} parent=0
    #allocation3 [shape = 'u8[16384]{0}', space=vmem, size = 0x4000, scoped, tag = 'input window, operand 0']
    #allocation4 [shape = 's32[2]{0}', space=sflag, size = 0x8, scoped, tag = 'scoped memory for tpu_custom_call.1']
    #allocation5 [shape = 's32[2]{0}', space=sflag, size = 0x8, scoped, tag = 'scoped memory for tpu_custom_call.1']
    #allocation6 [shape = 'u8[16384]{0}', space=vmem, size = 0x4000, scoped, tag = 'input window, operand 1']
    #allocation7 [shape = 's32[2]{0}', space=sflag, size = 0x8, scoped, tag = 'scoped memory for tpu_custom_call.1']
    #allocation8 [shape = 'u8[8192]{0}', space=vmem, size = 0x2000, scoped, tag = 'input window, operand 2, single buffered']
    #allocation9 [shape = 'u8[32768]{0}', space=vmem, size = 0x8000, scoped, tag = 'input window, operand 3, single buffered']
    #allocation10 [shape = 's32[1]{0}', space=sflag, size = 0x4, scoped, tag = 'scoped memory for tpu_custom_call.1']
    #allocation11 [shape = 'u8[8192]{0}', space=vmem, size = 0x2000, scoped, tag = 'output window, operand 0']
    %9 = vsyncpa [#allocation4], 0
    %s10 = scalar_lea.sflag [#allocation4], 1
    %11 = vsyncpa %s10, 0
    %12 = vsyncpa [#allocation7], 0
    %s13 = scalar_lea.sflag [#allocation7], 1
    %14 = vsyncpa %s13, 0
    %15 = vsyncpa [#allocation10], 0
    %16 = vsyncpa [#allocation5], 0
    %s17 = scalar_lea.sflag [#allocation5], 1
    %18 = vsyncpa %s17, 0
    loop: start=0, step=1, limit=4
    $region2: #{tpu_custom_call.1} parent=1 // loop_pre_header
      _
    $region3: #{tpu_custom_call.1} parent=1 // loop_header
      %s20 = sphi 0, %s24
      %p21 = scmp.ge.s32.totalorder %s20, 4
      %s27 = sphi 0, %s39
      %s28 = sphi 0, %s35
      %s29 = sphi 0, %s27
      %s30 = sphi 0, %s28
      %s31 = sphi 0, %s29
      %s32 = sphi 0, %s30
      %s44 = sphi 0, %s46
      %s47 = sphi 0, %s44
      %s48 = sphi 0, %s47
      %s64 = sphi 0, %s48
      %s72 = sphi 0, %s74
      %s75 = sphi 0, %s72
      %s76 = sphi 0, %s75
      %s92 = sphi 0, %s76
      %s96 = sphi 0, %s96
      %s98 = sphi 0, %s96
      %s99 = sphi 0, %s98
      %s113 = sphi 0, %s99
      %s117 = sphi 0, %s117
      %s119 = sphi 0, %s117
      %s120 = sphi 0, %s119
      %s134 = sphi 0, %s120
      %s140 = sphi 0, %s142
      %s143 = sphi 0, %s140
      %s144 = sphi 0, %s143
      %s160 = sphi 0, %s144
    $region4: #{tpu_custom_call.1} parent=1 // loop_header_branch
      %23 = sbr.rel (%p21) target = $region8
    $region5: #{tpu_custom_call.1} parent=1 // loop_body
      %s25 = ssub.s32 %s20, 1
      %s26 = ssub.s32 %s20, 2
      %s33 = sadd.s32 1, %s28
      %p34 = scmp.ge.s32.totalorder %s33, 1
      %s35 = scalar_select %p34, 0, %s33
      %s36 = sadd.s32 1, %s27
      %s37 = scalar_select %p34, %s36, %s27
      %p38 = scmp.ge.s32.totalorder %s37, 2
      %s39 = scalar_select %p38, 0, %s37
      %s40 = ssub.s32 %s27, %s39
      %s41 = ssub.s32 %s28, %s35
      %s42 = sor.u32 %s40, %s41
      %p43 = scmp.eq.s32.totalorder %s42, 0
      %s45 = sadd.s32 %s44, 1
      %s46 = scalar_select %p43, %s44, %s45
      %p49 = pneg %p43
      %p50 = scmp.eq.s32.totalorder %s20, 1
      %p51 = por %p49, %p50
      %p52 = scmp.ne.s32.totalorder %s44, %s47
      %p53 = scmp.eq.s32.totalorder %s20, 0
      %p54 = por %p52, %p53
      %p55 = scmp.ne.s32.totalorder %s44, %s47
      %p56 = scmp.eq.s32.totalorder %s25, 1
      %p57 = por %p55, %p56
      %p58 = scmp.ne.s32.totalorder %s47, %s48
      %p59 = scmp.eq.s32.totalorder %s25, 0
      %p60 = por %p58, %p59
      %p61 = scmp.ne.s32.totalorder %s47, %s48
      %p62 = scmp.eq.s32.totalorder %s26, 1
      %p63 = por %p61, %p62
      %p65 = scmp.ne.s32.totalorder %s48, %s64
      %p66 = scmp.eq.s32.totalorder %s26, 0
      %p67 = por %p65, %p66
      %s68 = ssub.s32 %s27, %s39
      %s69 = ssub.s32 %s28, %s35
      %s70 = sor.u32 %s68, %s69
      %p71 = scmp.eq.s32.totalorder %s70, 0
      %s73 = sadd.s32 %s72, 1
      %s74 = scalar_select %p71, %s72, %s73
      %p77 = pneg %p71
      %p78 = scmp.eq.s32.totalorder %s20, 1
      %p79 = por %p77, %p78
      %p80 = scmp.ne.s32.totalorder %s72, %s75
      %p81 = scmp.eq.s32.totalorder %s20, 0
      %p82 = por %p80, %p81
      %p83 = scmp.ne.s32.totalorder %s72, %s75
      %p84 = scmp.eq.s32.totalorder %s25, 1
      %p85 = por %p83, %p84
      %p86 = scmp.ne.s32.totalorder %s75, %s76
      %p87 = scmp.eq.s32.totalorder %s25, 0
      %p88 = por %p86, %p87
      %p89 = scmp.ne.s32.totalorder %s75, %s76
      %p90 = scmp.eq.s32.totalorder %s26, 1
      %p91 = por %p89, %p90
      %p93 = scmp.ne.s32.totalorder %s76, %s92
      %p94 = scmp.eq.s32.totalorder %s26, 0
      %p95 = por %p93, %p94
      %s97 = sadd.s32 %s96, 1
      %p100 = scmp.eq.s32.totalorder %s20, 1
      %p101 = scmp.ne.s32.totalorder %s96, %s98
      %p102 = scmp.eq.s32.totalorder %s20, 0
      %p103 = por %p101, %p102
      %p104 = scmp.ne.s32.totalorder %s96, %s98
      %p105 = scmp.eq.s32.totalorder %s25, 1
      %p106 = por %p104, %p105
      %p107 = scmp.ne.s32.totalorder %s98, %s99
      %p108 = scmp.eq.s32.totalorder %s25, 0
      %p109 = por %p107, %p108
      %p110 = scmp.ne.s32.totalorder %s98, %s99
      %p111 = scmp.eq.s32.totalorder %s26, 1
      %p112 = por %p110, %p111
      %p114 = scmp.ne.s32.totalorder %s99, %s113
      %p115 = scmp.eq.s32.totalorder %s26, 0
      %p116 = por %p114, %p115
      %s118 = sadd.s32 %s117, 1
      %p121 = scmp.eq.s32.totalorder %s20, 1
      %p122 = scmp.ne.s32.totalorder %s117, %s119
      %p123 = scmp.eq.s32.totalorder %s20, 0
      %p124 = por %p122, %p123
      %p125 = scmp.ne.s32.totalorder %s117, %s119
      %p126 = scmp.eq.s32.totalorder %s25, 1
      %p127 = por %p125, %p126
      %p128 = scmp.ne.s32.totalorder %s119, %s120
      %p129 = scmp.eq.s32.totalorder %s25, 0
      %p130 = por %p128, %p129
      %p131 = scmp.ne.s32.totalorder %s119, %s120
      %p132 = scmp.eq.s32.totalorder %s26, 1
      %p133 = por %p131, %p132
      %p135 = scmp.ne.s32.totalorder %s120, %s134
      %p136 = scmp.eq.s32.totalorder %s26, 0
      %p137 = por %p135, %p136
      %s138 = ssub.s32 %s27, %s39
      %p139 = scmp.eq.s32.totalorder %s138, 0
      %s141 = sadd.s32 %s140, 1
      %s142 = scalar_select %p139, %s140, %s141
      %p145 = pneg %p139
      %p146 = scmp.eq.s32.totalorder %s20, 1
      %p147 = por %p145, %p146
      %p148 = scmp.ne.s32.totalorder %s140, %s143
      %p149 = scmp.eq.s32.totalorder %s20, 0
      %p150 = por %p148, %p149
      %p151 = scmp.ne.s32.totalorder %s140, %s143
      %p152 = scmp.eq.s32.totalorder %s25, 1
      %p153 = por %p151, %p152
      %p154 = scmp.ne.s32.totalorder %s143, %s144
      %p155 = scmp.eq.s32.totalorder %s25, 0
      %p156 = por %p154, %p155
      %p157 = scmp.ne.s32.totalorder %s143, %s144
      %p158 = scmp.eq.s32.totalorder %s26, 1
      %p159 = por %p157, %p158
      %p161 = scmp.ne.s32.totalorder %s144, %s160
      %p162 = scmp.eq.s32.totalorder %s26, 0
      %p163 = por %p161, %p162
      %p164 = scmp.le.s32.totalorder 1, %s20
      %p165 = scmp.lt.s32.totalorder %s20, 3
      %p166 = pnand %p164, %p165
      %p167 = pneg %p166
      // Predicated region
      $region9: #{tpu_custom_call.1} parent=5 // pred_check
        _
      $region10: #{tpu_custom_call.1} parent=5 // pred_check_branch
        %169 = sbr.rel (%p166) target = $region12
      $region11: #{tpu_custom_call.1} parent=5 // pred_region
        %s170 = ssub.s32 %s20, 1
        // Predicated region
        $region13: #{tpu_custom_call.1} parent=11 // pred_check
          %p171 = pneg %p109
        $region14: #{tpu_custom_call.1} parent=11 // pred_check_branch
          %173 = sbr.rel (%p171) target = $region16
        $region15: #{tpu_custom_call.1} parent=11 // pred_region
          %s175 = ssub.s32 256, 256
          %176 = vsyncadd [#allocation7], %s175
          %s177 = sshll.u32 [#allocation8], 4
          %s178 = int_to_ptr.vmem [resolvable:$true] %s177
          %183 = dma.hbm_to_vmem [thread:$0]  %s2, 256, %s178, [#allocation7], 128, 128, 8
        $region16: #{tpu_custom_call.1} parent=11 // pred_fallthru
          _
        // Predicated region
        $region17: #{tpu_custom_call.1} parent=11 // pred_check
          %p184 = pneg %p130
        $region18: #{tpu_custom_call.1} parent=11 // pred_check_branch
          %186 = sbr.rel (%p184) target = $region20
        $region19: #{tpu_custom_call.1} parent=11 // pred_region
          %s188 = ssub.s32 1024, 1024
          %189 = vsyncadd [#allocation10], %s188
          %s190 = sshll.u32 [#allocation9], 4
          %s191 = int_to_ptr.vmem [resolvable:$true] %s190
          %196 = dma.hbm_to_vmem [thread:$0]  %s3, 1024, %s191, [#allocation10], 128, 128, 8
        $region20: #{tpu_custom_call.1} parent=11 // pred_fallthru
          _
      $region12: #{tpu_custom_call.1} parent=5 // pred_fallthru
        _
      %p197 = scmp.lt.s32.totalorder %s20, 2
      // Predicated region
      $region21: #{tpu_custom_call.1} parent=5 // pred_check
        %p198 = pneg %p197
      $region22: #{tpu_custom_call.1} parent=5 // pred_check_branch
        %200 = sbr.rel (%p198) target = $region24
      $region23: #{tpu_custom_call.1} parent=5 // pred_region
        // Predicated region
        $region25: #{tpu_custom_call.1} parent=23 // pred_check
          %p201 = pneg %p54
        $region26: #{tpu_custom_call.1} parent=23 // pred_check_branch
          %203 = sbr.rel (%p201) target = $region28
        $region27: #{tpu_custom_call.1} parent=23 // pred_region
          %s204 = sand.u32 %s44, 1
          %s205 = scalar_lea.sflag [#allocation4], %s204
          %s206 = sand.u32 %s44, 1
          %s207 = smul.addr %s206, 16
          %s208 = scalar_lea.vmem [#allocation3], %s207
          %s210 = ssub.s32 256, 256
          %211 = vsyncadd %s205, %s210
          %s212 = smul.addr %s27, 2
          %s213 = sadd.s32 %s28, %s212
          %s214 = smul.addr %s213, 128
          %s215 = scalar_lea.hbm %s0, %s214
          %s216 = sshll.u32 %s208, 4
          %s217 = int_to_ptr.vmem [resolvable:$true] %s216
          %222 = dma.hbm_to_vmem [thread:$0]  %s215, 256, %s217, %s205, 128, 128, 8
        $region28: #{tpu_custom_call.1} parent=23 // pred_fallthru
          _
        // Predicated region
        $region29: #{tpu_custom_call.1} parent=23 // pred_check
          %p223 = pneg %p82
        $region30: #{tpu_custom_call.1} parent=23 // pred_check_branch
          %225 = sbr.rel (%p223) target = $region32
        $region31: #{tpu_custom_call.1} parent=23 // pred_region
          %s226 = sand.u32 %s20, 1
          %s227 = scalar_lea.sflag [#allocation7], %s226
          %s228 = sand.u32 %s72, 1
          %s229 = smul.addr %s228, 16
          %s230 = scalar_lea.vmem [#allocation6], %s229
          %s232 = ssub.s32 256, 256
          %233 = vsyncadd %s227, %s232
          %s234 = smul.addr %s27, 2
          %s235 = sadd.s32 %s28, %s234
          %s236 = smul.addr %s235, 128
          %s237 = scalar_lea.hbm %s1, %s236
          %s238 = sshll.u32 %s230, 4
          %s239 = int_to_ptr.vmem [resolvable:$true] %s238
          %244 = dma.hbm_to_vmem [thread:$0]  %s237, 256, %s239, %s227, 128, 128, 8
        $region32: #{tpu_custom_call.1} parent=23 // pred_fallthru
          _
      $region24: #{tpu_custom_call.1} parent=5 // pred_fallthru
        _
      %p245 = scmp.le.s32.totalorder 1, %s20
      %p246 = scmp.lt.s32.totalorder %s20, 3
      %p247 = pnand %p245, %p246
      %p248 = pneg %p247
      // Predicated region
      $region33: #{tpu_custom_call.1} parent=5 // pred_check
        _
      $region34: #{tpu_custom_call.1} parent=5 // pred_check_branch
        %250 = sbr.rel (%p247) target = $region36
      $region35: #{tpu_custom_call.1} parent=5 // pred_region
        %s251 = ssub.s32 %s20, 1
        %s252 = sand.u32 %s47, 1
        %s253 = scalar_lea.sflag [#allocation4], %s252
        %s254 = sand.u32 %s47, 1
        %s255 = smul.addr %s254, 16
        %s256 = scalar_lea.vmem [#allocation3], %s255
        // Predicated region
        $region37: #{tpu_custom_call.1} parent=35 // pred_check
          %p257 = pneg %p60
        $region38: #{tpu_custom_call.1} parent=35 // pred_check_branch
          %259 = sbr.rel (%p257) target = $region40
        $region39: #{tpu_custom_call.1} parent=35 // pred_region
          %260 = dma.done %s253, 256
        $region40: #{tpu_custom_call.1} parent=35 // pred_fallthru
          _
        %s261 = sand.u32 %s25, 1
        %s262 = scalar_lea.sflag [#allocation7], %s261
        %s263 = sand.u32 %s75, 1
        %s264 = smul.addr %s263, 16
        %s265 = scalar_lea.vmem [#allocation6], %s264
        // Predicated region
        $region41: #{tpu_custom_call.1} parent=35 // pred_check
          %p266 = pneg %p88
        $region42: #{tpu_custom_call.1} parent=35 // pred_check_branch
          %268 = sbr.rel (%p266) target = $region44
        $region43: #{tpu_custom_call.1} parent=35 // pred_region
          %269 = dma.done %s262, 256
        $region44: #{tpu_custom_call.1} parent=35 // pred_fallthru
          _
        // Predicated region
        $region45: #{tpu_custom_call.1} parent=35 // pred_check
          %p270 = pneg %p109
        $region46: #{tpu_custom_call.1} parent=35 // pred_check_branch
          %272 = sbr.rel (%p270) target = $region48
        $region47: #{tpu_custom_call.1} parent=35 // pred_region
          %273 = dma.done [#allocation7], 256
        $region48: #{tpu_custom_call.1} parent=35 // pred_fallthru
          _
        // Predicated region
        $region49: #{tpu_custom_call.1} parent=35 // pred_check
          %p274 = pneg %p130
        $region50: #{tpu_custom_call.1} parent=35 // pred_check_branch
          %276 = sbr.rel (%p274) target = $region52
        $region51: #{tpu_custom_call.1} parent=35 // pred_region
          %277 = dma.done [#allocation10], 1024
        $region52: #{tpu_custom_call.1} parent=35 // pred_fallthru
          _
        %s278 = sand.u32 %s47, 1
        %s279 = scalar_lea.sflag [#allocation4], %s278
        %s280 = sand.u32 %s47, 1
        %s281 = smul.addr %s280, 16
        %s282 = scalar_lea.vmem [#allocation3], %s281
        %p283 = pneg %p60
        %p284 = pneg %p57
        %s285 = sand.u32 %s25, 1
        %s286 = scalar_lea.sflag [#allocation7], %s285
        %s287 = sand.u32 %s75, 1
        %s288 = smul.addr %s287, 16
        %s289 = scalar_lea.vmem [#allocation6], %s288
        %p290 = pneg %p88
        %p291 = pneg %p85
        %p292 = pneg %p109
        %p293 = pneg %p106
        %p294 = pneg %p130
        %p295 = pneg %p127
        %p296 = pneg %p156
        %p297 = pneg %p153
        %s298 = sand.u32 %s143, 1
        %s299 = scalar_lea.sflag [#allocation5], %s298
        %s300 = sand.u32 %s143, 1
        %s301 = smul.addr %s300, 8
        %s302 = scalar_lea.vmem [#allocation11], %s301
        %p303 = scmp.eq.s32.totalorder %s30, 0
        // Predicated region
        $region53: #{tpu_custom_call.1} parent=35 // pred_check
          %p304 = pneg %p303
        $region54: #{tpu_custom_call.1} parent=35 // pred_check_branch
          %306 = sbr.rel (%p304) target = $region56
        $region55: #{tpu_custom_call.1} parent=35 // pred_region
          %307 = vst [vmem:[#allocation2] sm:$0xff] 0.0
        $region56: #{tpu_custom_call.1} parent=35 // pred_fallthru
          _
        %v308 = vld [vmem:[%s256] sm:$0xff]
        %v309 = vld [vmem:[%s256 + $0x8] sm:$0xff]
        %v310 = vld [vmem:[%s265] sm:$0xff]
        %v311 = vld [vmem:[%s265 + $0x8] sm:$0xff]
        %v312 = vld [vmem:[#allocation8] sm:$0xff]
        %v313 = vld [vmem:[#allocation8 + $0x8] sm:$0xff]
        %v314 = vld [vmem:[#allocation9] sm:$0xff]
        %v315 = vld [vmem:[#allocation9 + $0x8] sm:$0xff]
        %v316 = vld [vmem:[#allocation9 + $0x10] sm:$0xff]
        %v317 = vld [vmem:[#allocation9 + $0x18] sm:$0xff]
        %v318 = vld [vmem:[#allocation9 + $0x20] sm:$0xff]
        %v319 = vld [vmem:[#allocation9 + $0x28] sm:$0xff]
        %v320 = vld [vmem:[#allocation9 + $0x30] sm:$0xff]
        %v321 = vld [vmem:[#allocation9 + $0x38] sm:$0xff]
        %vm322 = vcmask 130048
        %v324 = vsel %vm322, %v312, 0
        %v327 = vsel %vm322, %v313, 0
        %329 = vmatprep.subr.mxu0 0.0
        %330 = vmatpush1.msra.mxu0 %v308
        %331 = vmatprep.subr.mxu0 0.0
        %332 = vmatpush1.msra.mxu0 %v309
        %333 = vmatprep.subr.mxu0 0.0
        %334 = vmatpush1.msra.mxu0 0.0
        %335 = vmatprep.subr.mxu0 0.0
        %336 = vmatpush1.msra.mxu0 0.0
        %337 = vmatprep.subr.mxu0 0.0
        %338 = vmatpush1.msra.mxu0 0.0
        %339 = vmatprep.subr.mxu0 0.0
        %340 = vmatpush1.msra.mxu0 0.0
        %341 = vmatprep.subr.mxu0 0.0
        %342 = vmatpush1.msra.mxu0 0.0
        %343 = vmatprep.subr.mxu0 0.0
        %344 = vmatpush1.msra.mxu0 0.0
        %345 = vmatprep.subr.mxu0 0.0
        %346 = vmatpush1.msra.mxu0 0.0
        %347 = vmatprep.subr.mxu0 0.0
        %348 = vmatpush1.msra.mxu0 0.0
        %349 = vmatprep.subr.mxu0 0.0
        %350 = vmatpush1.msra.mxu0 0.0
        %351 = vmatprep.subr.mxu0 0.0
        %352 = vmatpush1.msra.mxu0 0.0
        %353 = vmatprep.subr.mxu0 0.0
        %354 = vmatpush1.msra.mxu0 0.0
        %355 = vmatprep.subr.mxu0 0.0
        %356 = vmatpush1.msra.mxu0 0.0
        %357 = vmatprep.subr.mxu0 0.0
        %358 = vmatpush1.msra.mxu0 0.0
        %359 = vmatprep.subr.mxu0 0.0
        %360 = vmatpush1.msra.mxu0 0.0
        %361 = vmatprep.subr.mxu0 0.0
        %362 = vmatpush1.msra.mxu0 0.0
        %363 = vmatprep.subr.mxu0 0.0
        %364 = vmatpush1.msra.mxu0 0.0
        %365 = vmatprep.subr.mxu0 0.0
        %366 = vmatpush1.msra.mxu0 0.0
        %367 = vmatprep.subr.mxu0 0.0
        %368 = vmatpush1.msra.mxu0 0.0
        %369 = vmatprep.subr.mxu0 0.0
        %370 = vmatpush1.msra.mxu0 0.0
        %371 = vmatprep.subr.mxu0 0.0
        %372 = vmatpush1.msra.mxu0 0.0
        %373 = vmatprep.subr.mxu0 0.0
        %374 = vmatpush1.msra.mxu0 0.0
        %375 = vmatprep.subr.mxu0 0.0
        %376 = vmatpush1.msra.mxu0 0.0
        %377 = vmatprep.subr.mxu0 0.0
        %378 = vmatpush1.msra.mxu0 0.0
        %379 = vmatprep.subr.mxu0 0.0
        %380 = vmatpush1.msra.mxu0 0.0
        %381 = vmatprep.subr.mxu0 0.0
        %382 = vmatpush1.msra.mxu0 0.0
        %383 = vmatprep.subr.mxu0 0.0
        %384 = vmatpush1.msra.mxu0 0.0
        %385 = vmatprep.subr.mxu0 0.0
        %386 = vmatpush1.msra.mxu0 0.0
        %387 = vmatprep.subr.mxu0 0.0
        %388 = vmatpush1.msra.mxu0 0.0
        %389 = vmatprep.subr.mxu0 0.0
        %390 = vmatpush1.msra.mxu0 0.0
        %391 = vmatprep.subr.mxu0 0.0
        %392 = vmatpush1.msra.mxu0 0.0
        %393 = vmatprep.mubr.f32.mxu0 0.0
        %394 = vmatmul.mubr.f32.gmra.mrb[0].mxu0 %v324
        %v395 = vpop.f32.mrb[0].mxu0
        %v396 = vadd.f32 0.0, %v395
        %v397 = vpop.f32.mrb[0].mxu0
        %398 = vmatprep.mubr.f32.mxu0 0.0
        %399 = vmatmul.mubr.f32.gmra.mrb[0].mxu0 %v327
        %v400 = vpop.f32.mrb[0].mxu0
        %v401 = vadd.f32 0.0, %v400
        %v402 = vpop.f32.mrb[0].mxu0
        %403 = vdwg.mxu0
        %vm404 = vcmask 523264
        %v406 = vsel %vm404, %v396, 0
        %v409 = vsel %vm404, %v401, 0
        %411 = vmatprep.subr.mxu0 0.0
        %412 = vmatpush1.msra.mxu0 %v314
        %413 = vmatprep.subr.mxu0 0.0
        %414 = vmatpush1.msra.mxu0 %v315
        %415 = vmatprep.subr.mxu0 0.0
        %416 = vmatpush1.msra.mxu0 %v316
        %417 = vmatprep.subr.mxu0 0.0
        %418 = vmatpush1.msra.mxu0 %v317
        %419 = vmatprep.subr.mxu0 0.0
        %420 = vmatpush1.msra.mxu0 %v318
        %421 = vmatprep.subr.mxu0 0.0
        %422 = vmatpush1.msra.mxu0 %v319
        %423 = vmatprep.subr.mxu0 0.0
        %424 = vmatpush1.msra.mxu0 %v320
        %425 = vmatprep.subr.mxu0 0.0
        %426 = vmatpush1.msra.mxu0 %v321
        %427 = vmatprep.subr.mxu0 0.0
        %428 = vmatpush1.msra.mxu0 0.0
        %429 = vmatprep.subr.mxu0 0.0
        %430 = vmatpush1.msra.mxu0 0.0
        %431 = vmatprep.subr.mxu0 0.0
        %432 = vmatpush1.msra.mxu0 0.0
        %433 = vmatprep.subr.mxu0 0.0
        %434 = vmatpush1.msra.mxu0 0.0
        %435 = vmatprep.subr.mxu0 0.0
        %436 = vmatpush1.msra.mxu0 0.0
        %437 = vmatprep.subr.mxu0 0.0
        %438 = vmatpush1.msra.mxu0 0.0
        %439 = vmatprep.subr.mxu0 0.0
        %440 = vmatpush1.msra.mxu0 0.0
        %441 = vmatprep.subr.mxu0 0.0
        %442 = vmatpush1.msra.mxu0 0.0
        %443 = vmatprep.subr.mxu0 0.0
        %444 = vmatpush1.msra.mxu0 0.0
        %445 = vmatprep.subr.mxu0 0.0
        %446 = vmatpush1.msra.mxu0 0.0
        %447 = vmatprep.subr.mxu0 0.0
        %448 = vmatpush1.msra.mxu0 0.0
        %449 = vmatprep.subr.mxu0 0.0
        %450 = vmatpush1.msra.mxu0 0.0
        %451 = vmatprep.subr.mxu0 0.0
        %452 = vmatpush1.msra.mxu0 0.0
        %453 = vmatprep.subr.mxu0 0.0
        %454 = vmatpush1.msra.mxu0 0.0
        %455 = vmatprep.subr.mxu0 0.0
        %456 = vmatpush1.msra.mxu0 0.0
        %457 = vmatprep.subr.mxu0 0.0
        %458 = vmatpush1.msra.mxu0 0.0
        %459 = vmatprep.subr.mxu0 0.0
        %460 = vmatpush1.msra.mxu0 0.0
        %461 = vmatprep.subr.mxu0 0.0
        %462 = vmatpush1.msra.mxu0 0.0
        %463 = vmatprep.subr.mxu0 0.0
        %464 = vmatpush1.msra.mxu0 0.0
        %465 = vmatprep.subr.mxu0 0.0
        %466 = vmatpush1.msra.mxu0 0.0
        %467 = vmatprep.subr.mxu0 0.0
        %468 = vmatpush1.msra.mxu0 0.0
        %469 = vmatprep.subr.mxu0 0.0
        %470 = vmatpush1.msra.mxu0 0.0
        %471 = vmatprep.subr.mxu0 0.0
        %472 = vmatpush1.msra.mxu0 0.0
        %473 = vmatprep.subr.mxu0 0.0
        %474 = vmatpush1.msra.mxu0 0.0
        %475 = vmatprep.mubr.f32.mxu0 0.0
        %476 = vmatmul.mubr.f32.gmra.mrb[0].mxu0 %v406
        %v477 = vpop.f32.mrb[0].mxu0
        %v478 = vadd.f32 0.0, %v477
        %v479 = vpop.f32.mrb[0].mxu0
        %480 = vmatprep.mubr.f32.mxu0 0.0
        %481 = vmatmul.mubr.f32.gmra.mrb[0].mxu0 %v409
        %v482 = vpop.f32.mrb[0].mxu0
        %v483 = vadd.f32 0.0, %v482
        %v484 = vpop.f32.mrb[0].mxu0
        %485 = vdwg.mxu0
        %486 = vmatprep.subr.mxu0 0.0
        %487 = vmatpush1.msra.mxu0 %v310
        %488 = vmatprep.subr.mxu0 0.0
        %489 = vmatpush1.msra.mxu0 %v311
        %490 = vmatprep.subr.mxu0 0.0
        %491 = vmatpush1.msra.mxu0 0.0
        %492 = vmatprep.subr.mxu0 0.0
        %493 = vmatpush1.msra.mxu0 0.0
        %494 = vmatprep.subr.mxu0 0.0
        %495 = vmatpush1.msra.mxu0 0.0
        %496 = vmatprep.subr.mxu0 0.0
        %497 = vmatpush1.msra.mxu0 0.0
        %498 = vmatprep.subr.mxu0 0.0
        %499 = vmatpush1.msra.mxu0 0.0
        %500 = vmatprep.subr.mxu0 0.0
        %501 = vmatpush1.msra.mxu0 0.0
        %502 = vmatprep.subr.mxu0 0.0
        %503 = vmatpush1.msra.mxu0 0.0
        %504 = vmatprep.subr.mxu0 0.0
        %505 = vmatpush1.msra.mxu0 0.0
        %506 = vmatprep.subr.mxu0 0.0
        %507 = vmatpush1.msra.mxu0 0.0
        %508 = vmatprep.subr.mxu0 0.0
        %509 = vmatpush1.msra.mxu0 0.0
        %510 = vmatprep.subr.mxu0 0.0
        %511 = vmatpush1.msra.mxu0 0.0
        %512 = vmatprep.subr.mxu0 0.0
        %513 = vmatpush1.msra.mxu0 0.0
        %514 = vmatprep.subr.mxu0 0.0
        %515 = vmatpush1.msra.mxu0 0.0
        %516 = vmatprep.subr.mxu0 0.0
        %517 = vmatpush1.msra.mxu0 0.0
        %518 = vmatprep.subr.mxu0 0.0
        %519 = vmatpush1.msra.mxu0 0.0
        %520 = vmatprep.subr.mxu0 0.0
        %521 = vmatpush1.msra.mxu0 0.0
        %522 = vmatprep.subr.mxu0 0.0
        %523 = vmatpush1.msra.mxu0 0.0
        %524 = vmatprep.subr.mxu0 0.0
        %525 = vmatpush1.msra.mxu0 0.0
        %526 = vmatprep.subr.mxu0 0.0
        %527 = vmatpush1.msra.mxu0 0.0
        %528 = vmatprep.subr.mxu0 0.0
        %529 = vmatpush1.msra.mxu0 0.0
        %530 = vmatprep.subr.mxu0 0.0
        %531 = vmatpush1.msra.mxu0 0.0
        %532 = vmatprep.subr.mxu0 0.0
        %533 = vmatpush1.msra.mxu0 0.0
        %534 = vmatprep.subr.mxu0 0.0
        %535 = vmatpush1.msra.mxu0 0.0
        %536 = vmatprep.subr.mxu0 0.0
        %537 = vmatpush1.msra.mxu0 0.0
        %538 = vmatprep.subr.mxu0 0.0
        %539 = vmatpush1.msra.mxu0 0.0
        %540 = vmatprep.subr.mxu0 0.0
        %541 = vmatpush1.msra.mxu0 0.0
        %542 = vmatprep.subr.mxu0 0.0
        %543 = vmatpush1.msra.mxu0 0.0
        %544 = vmatprep.subr.mxu0 0.0
        %545 = vmatpush1.msra.mxu0 0.0
        %546 = vmatprep.subr.mxu0 0.0
        %547 = vmatpush1.msra.mxu0 0.0
        %548 = vmatprep.subr.mxu0 0.0
        %549 = vmatpush1.msra.mxu0 0.0
        %550 = vmatprep.mubr.f32.mxu0 0.0
        %551 = vmatmul.mubr.f32.gmra.mrb[0].mxu0 %v324
        %v552 = vpop.f32.mrb[0].mxu0
        %v553 = vadd.f32 0.0, %v552
        %v554 = vpop.f32.mrb[0].mxu0
        %555 = vmatprep.mubr.f32.mxu0 0.0
        %556 = vmatmul.mubr.f32.gmra.mrb[0].mxu0 %v327
        %v557 = vpop.f32.mrb[0].mxu0
        %v558 = vadd.f32 0.0, %v557
        %v559 = vpop.f32.mrb[0].mxu0
        %560 = vdwg.mxu0
        %v562 = vsel %vm404, %v553, 0
        %v565 = vsel %vm404, %v558, 0
        %567 = vmatprep.subr.mxu0 0.0
        %568 = vmatpush1.msra.mxu0 %v314
        %569 = vmatprep.subr.mxu0 0.0
        %570 = vmatpush1.msra.mxu0 %v315
        %571 = vmatprep.subr.mxu0 0.0
        %572 = vmatpush1.msra.mxu0 %v316
        %573 = vmatprep.subr.mxu0 0.0
        %574 = vmatpush1.msra.mxu0 %v317
        %575 = vmatprep.subr.mxu0 0.0
        %576 = vmatpush1.msra.mxu0 %v318
        %577 = vmatprep.subr.mxu0 0.0
        %578 = vmatpush1.msra.mxu0 %v319
        %579 = vmatprep.subr.mxu0 0.0
        %580 = vmatpush1.msra.mxu0 %v320
        %581 = vmatprep.subr.mxu0 0.0
        %582 = vmatpush1.msra.mxu0 %v321
        %583 = vmatprep.subr.mxu0 0.0
        %584 = vmatpush1.msra.mxu0 0.0
        %585 = vmatprep.subr.mxu0 0.0
        %586 = vmatpush1.msra.mxu0 0.0
        %587 = vmatprep.subr.mxu0 0.0
        %588 = vmatpush1.msra.mxu0 0.0
        %589 = vmatprep.subr.mxu0 0.0
        %590 = vmatpush1.msra.mxu0 0.0
        %591 = vmatprep.subr.mxu0 0.0
        %592 = vmatpush1.msra.mxu0 0.0
        %593 = vmatprep.subr.mxu0 0.0
        %594 = vmatpush1.msra.mxu0 0.0
        %595 = vmatprep.subr.mxu0 0.0
        %596 = vmatpush1.msra.mxu0 0.0
        %597 = vmatprep.subr.mxu0 0.0
        %598 = vmatpush1.msra.mxu0 0.0
        %599 = vmatprep.subr.mxu0 0.0
        %600 = vmatpush1.msra.mxu0 0.0
        %601 = vmatprep.subr.mxu0 0.0
        %602 = vmatpush1.msra.mxu0 0.0
        %603 = vmatprep.subr.mxu0 0.0
        %604 = vmatpush1.msra.mxu0 0.0
        %605 = vmatprep.subr.mxu0 0.0
        %606 = vmatpush1.msra.mxu0 0.0
        %607 = vmatprep.subr.mxu0 0.0
        %608 = vmatpush1.msra.mxu0 0.0
        %609 = vmatprep.subr.mxu0 0.0
        %610 = vmatpush1.msra.mxu0 0.0
        %611 = vmatprep.subr.mxu0 0.0
        %612 = vmatpush1.msra.mxu0 0.0
        %613 = vmatprep.subr.mxu0 0.0
        %614 = vmatpush1.msra.mxu0 0.0
        %615 = vmatprep.subr.mxu0 0.0
        %616 = vmatpush1.msra.mxu0 0.0
        %617 = vmatprep.subr.mxu0 0.0
        %618 = vmatpush1.msra.mxu0 0.0
        %619 = vmatprep.subr.mxu0 0.0
        %620 = vmatpush1.msra.mxu0 0.0
        %621 = vmatprep.subr.mxu0 0.0
        %622 = vmatpush1.msra.mxu0 0.0
        %623 = vmatprep.subr.mxu0 0.0
        %624 = vmatpush1.msra.mxu0 0.0
        %625 = vmatprep.subr.mxu0 0.0
        %626 = vmatpush1.msra.mxu0 0.0
        %627 = vmatprep.subr.mxu0 0.0
        %628 = vmatpush1.msra.mxu0 0.0
        %629 = vmatprep.subr.mxu0 0.0
        %630 = vmatpush1.msra.mxu0 0.0
        %631 = vmatprep.mubr.f32.mxu0 0.0
        %632 = vmatmul.mubr.f32.gmra.mrb[0].mxu0 %v562
        %v633 = vpop.f32.mrb[0].mxu0
        %v634 = vadd.f32 0.0, %v633
        %v635 = vpop.f32.mrb[0].mxu0
        %636 = vmatprep.mubr.f32.mxu0 0.0
        %637 = vmatmul.mubr.f32.gmra.mrb[0].mxu0 %v565
        %v638 = vpop.f32.mrb[0].mxu0
        %v639 = vadd.f32 0.0, %v638
        %v640 = vpop.f32.mrb[0].mxu0
        %641 = vdwg.mxu0
        %v642 = vmul.f32 %v478, %v634
        %v643 = vmul.f32 %v483, %v639
        %v644 = vmul.f32 %v478, %v478
        %v645 = vmul.f32 %v483, %v483
        %v646 = vmul.f32 %v634, %v634
        %v647 = vmul.f32 %v639, %v639
        %v648 = vmul.f32 %v308, %v308
        %v649 = vmul.f32 %v309, %v309
        %650 = vmatprep.subr.mxu0 0.0
        %651 = vmatpush1.msra.mxu0 %v648
        %652 = vmatprep.subr.mxu0 0.0
        %653 = vmatpush1.msra.mxu0 %v649
        %654 = vmatprep.subr.mxu0 0.0
        %655 = vmatpush1.msra.mxu0 0.0
        %656 = vmatprep.subr.mxu0 0.0
        %657 = vmatpush1.msra.mxu0 0.0
        %658 = vmatprep.subr.mxu0 0.0
        %659 = vmatpush1.msra.mxu0 0.0
        %660 = vmatprep.subr.mxu0 0.0
        %661 = vmatpush1.msra.mxu0 0.0
        %662 = vmatprep.subr.mxu0 0.0
        %663 = vmatpush1.msra.mxu0 0.0
        %664 = vmatprep.subr.mxu0 0.0
        %665 = vmatpush1.msra.mxu0 0.0
        %666 = vmatprep.subr.mxu0 0.0
        %667 = vmatpush1.msra.mxu0 0.0
        %668 = vmatprep.subr.mxu0 0.0
        %669 = vmatpush1.msra.mxu0 0.0
        %670 = vmatprep.subr.mxu0 0.0
        %671 = vmatpush1.msra.mxu0 0.0
        %672 = vmatprep.subr.mxu0 0.0
        %673 = vmatpush1.msra.mxu0 0.0
        %674 = vmatprep.subr.mxu0 0.0
        %675 = vmatpush1.msra.mxu0 0.0
        %676 = vmatprep.subr.mxu0 0.0
        %677 = vmatpush1.msra.mxu0 0.0
        %678 = vmatprep.subr.mxu0 0.0
        %679 = vmatpush1.msra.mxu0 0.0
        %680 = vmatprep.subr.mxu0 0.0
        %681 = vmatpush1.msra.mxu0 0.0
        %682 = vmatprep.subr.mxu0 0.0
        %683 = vmatpush1.msra.mxu0 0.0
        %684 = vmatprep.subr.mxu0 0.0
        %685 = vmatpush1.msra.mxu0 0.0
        %686 = vmatprep.subr.mxu0 0.0
        %687 = vmatpush1.msra.mxu0 0.0
        %688 = vmatprep.subr.mxu0 0.0
        %689 = vmatpush1.msra.mxu0 0.0
        %690 = vmatprep.subr.mxu0 0.0
        %691 = vmatpush1.msra.mxu0 0.0
        %692 = vmatprep.subr.mxu0 0.0
        %693 = vmatpush1.msra.mxu0 0.0
        %694 = vmatprep.subr.mxu0 0.0
        %695 = vmatpush1.msra.mxu0 0.0
        %696 = vmatprep.subr.mxu0 0.0
        %697 = vmatpush1.msra.mxu0 0.0
        %698 = vmatprep.subr.mxu0 0.0
        %699 = vmatpush1.msra.mxu0 0.0
        %700 = vmatprep.subr.mxu0 0.0
        %701 = vmatpush1.msra.mxu0 0.0
        %702 = vmatprep.subr.mxu0 0.0
        %703 = vmatpush1.msra.mxu0 0.0
        %704 = vmatprep.subr.mxu0 0.0
        %705 = vmatpush1.msra.mxu0 0.0
        %706 = vmatprep.subr.mxu0 0.0
        %707 = vmatpush1.msra.mxu0 0.0
        %708 = vmatprep.subr.mxu0 0.0
        %709 = vmatpush1.msra.mxu0 0.0
        %710 = vmatprep.subr.mxu0 0.0
        %711 = vmatpush1.msra.mxu0 0.0
        %712 = vmatprep.subr.mxu0 0.0
        %713 = vmatpush1.msra.mxu0 0.0
        %714 = vmatprep.mubr.f32.mxu0 0.0
        %715 = vmatmul.mubr.f32.gmra.mrb[0].mxu0 %v324
        %v716 = vpop.f32.mrb[0].mxu0
        %v717 = vadd.f32 0.0, %v716
        %v718 = vpop.f32.mrb[0].mxu0
        %719 = vmatprep.mubr.f32.mxu0 0.0
        %720 = vmatmul.mubr.f32.gmra.mrb[0].mxu0 %v327
        %v721 = vpop.f32.mrb[0].mxu0
        %v722 = vadd.f32 0.0, %v721
        %v723 = vpop.f32.mrb[0].mxu0
        %724 = vdwg.mxu0
        %v726 = vsel %vm404, %v717, 0
        %v729 = vsel %vm404, %v722, 0
        %731 = vmatprep.subr.mxu0 0.0
        %732 = vmatpush1.msra.mxu0 %v314
        %733 = vmatprep.subr.mxu0 0.0
        %734 = vmatpush1.msra.mxu0 %v315
        %735 = vmatprep.subr.mxu0 0.0
        %736 = vmatpush1.msra.mxu0 %v316
        %737 = vmatprep.subr.mxu0 0.0
        %738 = vmatpush1.msra.mxu0 %v317
        %739 = vmatprep.subr.mxu0 0.0
        %740 = vmatpush1.msra.mxu0 %v318
        %741 = vmatprep.subr.mxu0 0.0
        %742 = vmatpush1.msra.mxu0 %v319
        %743 = vmatprep.subr.mxu0 0.0
        %744 = vmatpush1.msra.mxu0 %v320
        %745 = vmatprep.subr.mxu0 0.0
        %746 = vmatpush1.msra.mxu0 %v321
        %747 = vmatprep.subr.mxu0 0.0
        %748 = vmatpush1.msra.mxu0 0.0
        %749 = vmatprep.subr.mxu0 0.0
        %750 = vmatpush1.msra.mxu0 0.0
        %751 = vmatprep.subr.mxu0 0.0
        %752 = vmatpush1.msra.mxu0 0.0
        %753 = vmatprep.subr.mxu0 0.0
        %754 = vmatpush1.msra.mxu0 0.0
        %755 = vmatprep.subr.mxu0 0.0
        %756 = vmatpush1.msra.mxu0 0.0
        %757 = vmatprep.subr.mxu0 0.0
        %758 = vmatpush1.msra.mxu0 0.0
        %759 = vmatprep.subr.mxu0 0.0
        %760 = vmatpush1.msra.mxu0 0.0
        %761 = vmatprep.subr.mxu0 0.0
        %762 = vmatpush1.msra.mxu0 0.0
        %763 = vmatprep.subr.mxu0 0.0
        %764 = vmatpush1.msra.mxu0 0.0
        %765 = vmatprep.subr.mxu0 0.0
        %766 = vmatpush1.msra.mxu0 0.0
        %767 = vmatprep.subr.mxu0 0.0
        %768 = vmatpush1.msra.mxu0 0.0
        %769 = vmatprep.subr.mxu0 0.0
        %770 = vmatpush1.msra.mxu0 0.0
        %771 = vmatprep.subr.mxu0 0.0
        %772 = vmatpush1.msra.mxu0 0.0
        %773 = vmatprep.subr.mxu0 0.0
        %774 = vmatpush1.msra.mxu0 0.0
        %775 = vmatprep.subr.mxu0 0.0
        %776 = vmatpush1.msra.mxu0 0.0
        %777 = vmatprep.subr.mxu0 0.0
        %778 = vmatpush1.msra.mxu0 0.0
        %779 = vmatprep.subr.mxu0 0.0
        %780 = vmatpush1.msra.mxu0 0.0
        %781 = vmatprep.subr.mxu0 0.0
        %782 = vmatpush1.msra.mxu0 0.0
        %783 = vmatprep.subr.mxu0 0.0
        %784 = vmatpush1.msra.mxu0 0.0
        %785 = vmatprep.subr.mxu0 0.0
        %786 = vmatpush1.msra.mxu0 0.0
        %787 = vmatprep.subr.mxu0 0.0
        %788 = vmatpush1.msra.mxu0 0.0
        %789 = vmatprep.subr.mxu0 0.0
        %790 = vmatpush1.msra.mxu0 0.0
        %791 = vmatprep.subr.mxu0 0.0
        %792 = vmatpush1.msra.mxu0 0.0
        %793 = vmatprep.subr.mxu0 0.0
        %794 = vmatpush1.msra.mxu0 0.0
        %795 = vmatprep.mubr.f32.mxu0 0.0
        %796 = vmatmul.mubr.f32.gmra.mrb[0].mxu0 %v726
        %v797 = vpop.f32.mrb[0].mxu0
        %v798 = vadd.f32 0.0, %v797
        %v799 = vpop.f32.mrb[0].mxu0
        %800 = vmatprep.mubr.f32.mxu0 0.0
        %801 = vmatmul.mubr.f32.gmra.mrb[0].mxu0 %v729
        %v802 = vpop.f32.mrb[0].mxu0
        %v803 = vadd.f32 0.0, %v802
        %v804 = vpop.f32.mrb[0].mxu0
        %805 = vdwg.mxu0
        %v806 = vsub.f32 %v798, %v644
        %v807 = vsub.f32 %v803, %v645
        %v808 = vmul.f32 %v310, %v310
        %v809 = vmul.f32 %v311, %v311
        %810 = vmatprep.subr.mxu0 0.0
        %811 = vmatpush1.msra.mxu0 %v808
        %812 = vmatprep.subr.mxu0 0.0
        %813 = vmatpush1.msra.mxu0 %v809
        %814 = vmatprep.subr.mxu0 0.0
        %815 = vmatpush1.msra.mxu0 0.0
        %816 = vmatprep.subr.mxu0 0.0
        %817 = vmatpush1.msra.mxu0 0.0
        %818 = vmatprep.subr.mxu0 0.0
        %819 = vmatpush1.msra.mxu0 0.0
        %820 = vmatprep.subr.mxu0 0.0
        %821 = vmatpush1.msra.mxu0 0.0
        %822 = vmatprep.subr.mxu0 0.0
        %823 = vmatpush1.msra.mxu0 0.0
        %824 = vmatprep.subr.mxu0 0.0
        %825 = vmatpush1.msra.mxu0 0.0
        %826 = vmatprep.subr.mxu0 0.0
        %827 = vmatpush1.msra.mxu0 0.0
        %828 = vmatprep.subr.mxu0 0.0
        %829 = vmatpush1.msra.mxu0 0.0
        %830 = vmatprep.subr.mxu0 0.0
        %831 = vmatpush1.msra.mxu0 0.0
        %832 = vmatprep.subr.mxu0 0.0
        %833 = vmatpush1.msra.mxu0 0.0
        %834 = vmatprep.subr.mxu0 0.0
        %835 = vmatpush1.msra.mxu0 0.0
        %836 = vmatprep.subr.mxu0 0.0
        %837 = vmatpush1.msra.mxu0 0.0
        %838 = vmatprep.subr.mxu0 0.0
        %839 = vmatpush1.msra.mxu0 0.0
        %840 = vmatprep.subr.mxu0 0.0
        %841 = vmatpush1.msra.mxu0 0.0
        %842 = vmatprep.subr.mxu0 0.0
        %843 = vmatpush1.msra.mxu0 0.0
        %844 = vmatprep.subr.mxu0 0.0
        %845 = vmatpush1.msra.mxu0 0.0
        %846 = vmatprep.subr.mxu0 0.0
        %847 = vmatpush1.msra.mxu0 0.0
        %848 = vmatprep.subr.mxu0 0.0
        %849 = vmatpush1.msra.mxu0 0.0
        %850 = vmatprep.subr.mxu0 0.0
        %851 = vmatpush1.msra.mxu0 0.0
        %852 = vmatprep.subr.mxu0 0.0
        %853 = vmatpush1.msra.mxu0 0.0
        %854 = vmatprep.subr.mxu0 0.0
        %855 = vmatpush1.msra.mxu0 0.0
        %856 = vmatprep.subr.mxu0 0.0
        %857 = vmatpush1.msra.mxu0 0.0
        %858 = vmatprep.subr.mxu0 0.0
        %859 = vmatpush1.msra.mxu0 0.0
        %860 = vmatprep.subr.mxu0 0.0
        %861 = vmatpush1.msra.mxu0 0.0
        %862 = vmatprep.subr.mxu0 0.0
        %863 = vmatpush1.msra.mxu0 0.0
        %864 = vmatprep.subr.mxu0 0.0
        %865 = vmatpush1.msra.mxu0 0.0
        %866 = vmatprep.subr.mxu0 0.0
        %867 = vmatpush1.msra.mxu0 0.0
        %868 = vmatprep.subr.mxu0 0.0
        %869 = vmatpush1.msra.mxu0 0.0
        %870 = vmatprep.subr.mxu0 0.0
        %871 = vmatpush1.msra.mxu0 0.0
        %872 = vmatprep.subr.mxu0 0.0
        %873 = vmatpush1.msra.mxu0 0.0
        %874 = vmatprep.mubr.f32.mxu0 0.0
        %875 = vmatmul.mubr.f32.gmra.mrb[0].mxu0 %v324
        %v876 = vpop.f32.mrb[0].mxu0
        %v877 = vadd.f32 0.0, %v876
        %v878 = vpop.f32.mrb[0].mxu0
        %879 = vmatprep.mubr.f32.mxu0 0.0
        %880 = vmatmul.mubr.f32.gmra.mrb[0].mxu0 %v327
        %v881 = vpop.f32.mrb[0].mxu0
        %v882 = vadd.f32 0.0, %v881
        %v883 = vpop.f32.mrb[0].mxu0
        %884 = vdwg.mxu0
        %v886 = vsel %vm404, %v877, 0
        %v889 = vsel %vm404, %v882, 0
        %891 = vmatprep.subr.mxu0 0.0
        %892 = vmatpush1.msra.mxu0 %v314
        %893 = vmatprep.subr.mxu0 0.0
        %894 = vmatpush1.msra.mxu0 %v315
        %895 = vmatprep.subr.mxu0 0.0
        %896 = vmatpush1.msra.mxu0 %v316
        %897 = vmatprep.subr.mxu0 0.0
        %898 = vmatpush1.msra.mxu0 %v317
        %899 = vmatprep.subr.mxu0 0.0
        %900 = vmatpush1.msra.mxu0 %v318
        %901 = vmatprep.subr.mxu0 0.0
        %902 = vmatpush1.msra.mxu0 %v319
        %903 = vmatprep.subr.mxu0 0.0
        %904 = vmatpush1.msra.mxu0 %v320
        %905 = vmatprep.subr.mxu0 0.0
        %906 = vmatpush1.msra.mxu0 %v321
        %907 = vmatprep.subr.mxu0 0.0
        %908 = vmatpush1.msra.mxu0 0.0
        %909 = vmatprep.subr.mxu0 0.0
        %910 = vmatpush1.msra.mxu0 0.0
        %911 = vmatprep.subr.mxu0 0.0
        %912 = vmatpush1.msra.mxu0 0.0
        %913 = vmatprep.subr.mxu0 0.0
        %914 = vmatpush1.msra.mxu0 0.0
        %915 = vmatprep.subr.mxu0 0.0
        %916 = vmatpush1.msra.mxu0 0.0
        %917 = vmatprep.subr.mxu0 0.0
        %918 = vmatpush1.msra.mxu0 0.0
        %919 = vmatprep.subr.mxu0 0.0
        %920 = vmatpush1.msra.mxu0 0.0
        %921 = vmatprep.subr.mxu0 0.0
        %922 = vmatpush1.msra.mxu0 0.0
        %923 = vmatprep.subr.mxu0 0.0
        %924 = vmatpush1.msra.mxu0 0.0
        %925 = vmatprep.subr.mxu0 0.0
        %926 = vmatpush1.msra.mxu0 0.0
        %927 = vmatprep.subr.mxu0 0.0
        %928 = vmatpush1.msra.mxu0 0.0
        %929 = vmatprep.subr.mxu0 0.0
        %930 = vmatpush1.msra.mxu0 0.0
        %931 = vmatprep.subr.mxu0 0.0
        %932 = vmatpush1.msra.mxu0 0.0
        %933 = vmatprep.subr.mxu0 0.0
        %934 = vmatpush1.msra.mxu0 0.0
        %935 = vmatprep.subr.mxu0 0.0
        %936 = vmatpush1.msra.mxu0 0.0
        %937 = vmatprep.subr.mxu0 0.0
        %938 = vmatpush1.msra.mxu0 0.0
        %939 = vmatprep.subr.mxu0 0.0
        %940 = vmatpush1.msra.mxu0 0.0
        %941 = vmatprep.subr.mxu0 0.0
        %942 = vmatpush1.msra.mxu0 0.0
        %943 = vmatprep.subr.mxu0 0.0
        %944 = vmatpush1.msra.mxu0 0.0
        %945 = vmatprep.subr.mxu0 0.0
        %946 = vmatpush1.msra.mxu0 0.0
        %947 = vmatprep.subr.mxu0 0.0
        %948 = vmatpush1.msra.mxu0 0.0
        %949 = vmatprep.subr.mxu0 0.0
        %950 = vmatpush1.msra.mxu0 0.0
        %951 = vmatprep.subr.mxu0 0.0
        %952 = vmatpush1.msra.mxu0 0.0
        %953 = vmatprep.subr.mxu0 0.0
        %954 = vmatpush1.msra.mxu0 0.0
        %955 = vmatprep.mubr.f32.mxu0 0.0
        %956 = vmatmul.mubr.f32.gmra.mrb[0].mxu0 %v886
        %v957 = vpop.f32.mrb[0].mxu0
        %v958 = vadd.f32 0.0, %v957
        %v959 = vpop.f32.mrb[0].mxu0
        %960 = vmatprep.mubr.f32.mxu0 0.0
        %961 = vmatmul.mubr.f32.gmra.mrb[0].mxu0 %v889
        %v962 = vpop.f32.mrb[0].mxu0
        %v963 = vadd.f32 0.0, %v962
        %v964 = vpop.f32.mrb[0].mxu0
        %965 = vdwg.mxu0
        %v966 = vsub.f32 %v958, %v646
        %v967 = vsub.f32 %v963, %v647
        %v968 = vmul.f32 %v308, %v310
        %v969 = vmul.f32 %v309, %v311
        %970 = vmatprep.subr.mxu0 0.0
        %971 = vmatpush1.msra.mxu0 %v968
        %972 = vmatprep.subr.mxu0 0.0
        %973 = vmatpush1.msra.mxu0 %v969
        %974 = vmatprep.subr.mxu0 0.0
        %975 = vmatpush1.msra.mxu0 0.0
        %976 = vmatprep.subr.mxu0 0.0
        %977 = vmatpush1.msra.mxu0 0.0
        %978 = vmatprep.subr.mxu0 0.0
        %979 = vmatpush1.msra.mxu0 0.0
        %980 = vmatprep.subr.mxu0 0.0
        %981 = vmatpush1.msra.mxu0 0.0
        %982 = vmatprep.subr.mxu0 0.0
        %983 = vmatpush1.msra.mxu0 0.0
        %984 = vmatprep.subr.mxu0 0.0
        %985 = vmatpush1.msra.mxu0 0.0
        %986 = vmatprep.subr.mxu0 0.0
        %987 = vmatpush1.msra.mxu0 0.0
        %988 = vmatprep.subr.mxu0 0.0
        %989 = vmatpush1.msra.mxu0 0.0
        %990 = vmatprep.subr.mxu0 0.0
        %991 = vmatpush1.msra.mxu0 0.0
        %992 = vmatprep.subr.mxu0 0.0
        %993 = vmatpush1.msra.mxu0 0.0
        %994 = vmatprep.subr.mxu0 0.0
        %995 = vmatpush1.msra.mxu0 0.0
        %996 = vmatprep.subr.mxu0 0.0
        %997 = vmatpush1.msra.mxu0 0.0
        %998 = vmatprep.subr.mxu0 0.0
        %999 = vmatpush1.msra.mxu0 0.0
        %1000 = vmatprep.subr.mxu0 0.0
        %1001 = vmatpush1.msra.mxu0 0.0
        %1002 = vmatprep.subr.mxu0 0.0
        %1003 = vmatpush1.msra.mxu0 0.0
        %1004 = vmatprep.subr.mxu0 0.0
        %1005 = vmatpush1.msra.mxu0 0.0
        %1006 = vmatprep.subr.mxu0 0.0
        %1007 = vmatpush1.msra.mxu0 0.0
        %1008 = vmatprep.subr.mxu0 0.0
        %1009 = vmatpush1.msra.mxu0 0.0
        %1010 = vmatprep.subr.mxu0 0.0
        %1011 = vmatpush1.msra.mxu0 0.0
        %1012 = vmatprep.subr.mxu0 0.0
        %1013 = vmatpush1.msra.mxu0 0.0
        %1014 = vmatprep.subr.mxu0 0.0
        %1015 = vmatpush1.msra.mxu0 0.0
        %1016 = vmatprep.subr.mxu0 0.0
        %1017 = vmatpush1.msra.mxu0 0.0
        %1018 = vmatprep.subr.mxu0 0.0
        %1019 = vmatpush1.msra.mxu0 0.0
        %1020 = vmatprep.subr.mxu0 0.0
        %1021 = vmatpush1.msra.mxu0 0.0
        %1022 = vmatprep.subr.mxu0 0.0
        %1023 = vmatpush1.msra.mxu0 0.0
        %1024 = vmatprep.subr.mxu0 0.0
        %1025 = vmatpush1.msra.mxu0 0.0
        %1026 = vmatprep.subr.mxu0 0.0
        %1027 = vmatpush1.msra.mxu0 0.0
        %1028 = vmatprep.subr.mxu0 0.0
        %1029 = vmatpush1.msra.mxu0 0.0
        %1030 = vmatprep.subr.mxu0 0.0
        %1031 = vmatpush1.msra.mxu0 0.0
        %1032 = vmatprep.subr.mxu0 0.0
        %1033 = vmatpush1.msra.mxu0 0.0
        %1034 = vmatprep.mubr.f32.mxu0 0.0
        %1035 = vmatmul.mubr.f32.gmra.mrb[0].mxu0 %v324
        %v1036 = vpop.f32.mrb[0].mxu0
        %v1037 = vadd.f32 0.0, %v1036
        %v1038 = vpop.f32.mrb[0].mxu0
        %1039 = vmatprep.mubr.f32.mxu0 0.0
        %1040 = vmatmul.mubr.f32.gmra.mrb[0].mxu0 %v327
        %v1041 = vpop.f32.mrb[0].mxu0
        %v1042 = vadd.f32 0.0, %v1041
        %v1043 = vpop.f32.mrb[0].mxu0
        %1044 = vdwg.mxu0
        %v1046 = vsel %vm404, %v1037, 0
        %v1049 = vsel %vm404, %v1042, 0
        %1051 = vmatprep.subr.mxu0 0.0
        %1052 = vmatpush1.msra.mxu0 %v314
        %1053 = vmatprep.subr.mxu0 0.0
        %1054 = vmatpush1.msra.mxu0 %v315
        %1055 = vmatprep.subr.mxu0 0.0
        %1056 = vmatpush1.msra.mxu0 %v316
        %1057 = vmatprep.subr.mxu0 0.0
        %1058 = vmatpush1.msra.mxu0 %v317
        %1059 = vmatprep.subr.mxu0 0.0
        %1060 = vmatpush1.msra.mxu0 %v318
        %1061 = vmatprep.subr.mxu0 0.0
        %1062 = vmatpush1.msra.mxu0 %v319
        %1063 = vmatprep.subr.mxu0 0.0
        %1064 = vmatpush1.msra.mxu0 %v320
        %1065 = vmatprep.subr.mxu0 0.0
        %1066 = vmatpush1.msra.mxu0 %v321
        %1067 = vmatprep.subr.mxu0 0.0
        %1068 = vmatpush1.msra.mxu0 0.0
        %1069 = vmatprep.subr.mxu0 0.0
        %1070 = vmatpush1.msra.mxu0 0.0
        %1071 = vmatprep.subr.mxu0 0.0
        %1072 = vmatpush1.msra.mxu0 0.0
        %1073 = vmatprep.subr.mxu0 0.0
        %1074 = vmatpush1.msra.mxu0 0.0
        %1075 = vmatprep.subr.mxu0 0.0
        %1076 = vmatpush1.msra.mxu0 0.0
        %1077 = vmatprep.subr.mxu0 0.0
        %1078 = vmatpush1.msra.mxu0 0.0
        %1079 = vmatprep.subr.mxu0 0.0
        %1080 = vmatpush1.msra.mxu0 0.0
        %1081 = vmatprep.subr.mxu0 0.0
        %1082 = vmatpush1.msra.mxu0 0.0
        %1083 = vmatprep.subr.mxu0 0.0
        %1084 = vmatpush1.msra.mxu0 0.0
        %1085 = vmatprep.subr.mxu0 0.0
        %1086 = vmatpush1.msra.mxu0 0.0
        %1087 = vmatprep.subr.mxu0 0.0
        %1088 = vmatpush1.msra.mxu0 0.0
        %1089 = vmatprep.subr.mxu0 0.0
        %1090 = vmatpush1.msra.mxu0 0.0
        %1091 = vmatprep.subr.mxu0 0.0
        %1092 = vmatpush1.msra.mxu0 0.0
        %1093 = vmatprep.subr.mxu0 0.0
        %1094 = vmatpush1.msra.mxu0 0.0
        %1095 = vmatprep.subr.mxu0 0.0
        %1096 = vmatpush1.msra.mxu0 0.0
        %1097 = vmatprep.subr.mxu0 0.0
        %1098 = vmatpush1.msra.mxu0 0.0
        %1099 = vmatprep.subr.mxu0 0.0
        %1100 = vmatpush1.msra.mxu0 0.0
        %1101 = vmatprep.subr.mxu0 0.0
        %1102 = vmatpush1.msra.mxu0 0.0
        %1103 = vmatprep.subr.mxu0 0.0
        %1104 = vmatpush1.msra.mxu0 0.0
        %1105 = vmatprep.subr.mxu0 0.0
        %1106 = vmatpush1.msra.mxu0 0.0
        %1107 = vmatprep.subr.mxu0 0.0
        %1108 = vmatpush1.msra.mxu0 0.0
        %1109 = vmatprep.subr.mxu0 0.0
        %1110 = vmatpush1.msra.mxu0 0.0
        %1111 = vmatprep.subr.mxu0 0.0
        %1112 = vmatpush1.msra.mxu0 0.0
        %1113 = vmatprep.subr.mxu0 0.0
        %1114 = vmatpush1.msra.mxu0 0.0
        %1115 = vmatprep.mubr.f32.mxu0 0.0
        %1116 = vmatmul.mubr.f32.gmra.mrb[0].mxu0 %v1046
        %v1117 = vpop.f32.mrb[0].mxu0
        %v1118 = vadd.f32 0.0, %v1117
        %v1119 = vpop.f32.mrb[0].mxu0
        %1120 = vmatprep.mubr.f32.mxu0 0.0
        %1121 = vmatmul.mubr.f32.gmra.mrb[0].mxu0 %v1049
        %v1122 = vpop.f32.mrb[0].mxu0
        %v1123 = vadd.f32 0.0, %v1122
        %v1124 = vpop.f32.mrb[0].mxu0
        %1125 = vdwg.mxu0
        %v1126 = vsub.f32 %v1118, %v642
        %v1127 = vsub.f32 %v1123, %v643
        %v1128 = vmul.f32 %v642, 2.0
        %v1129 = vmul.f32 %v643, 2.0
        %v1130 = vadd.f32 %v1128, 0.0001
        %v1131 = vadd.f32 %v1129, 0.0001
        %v1132 = vmul.f32 %v1126, 2.0
        %v1133 = vmul.f32 %v1127, 2.0
        %v1134 = vadd.f32 %v1132, 0.0009
        %v1135 = vadd.f32 %v1133, 0.0009
        %v1136 = vmul.f32 %v1130, %v1134
        %v1137 = vmul.f32 %v1131, %v1135
        %v1138 = vadd.f32 %v644, %v646
        %v1139 = vadd.f32 %v645, %v647
        %v1140 = vadd.f32 %v1138, 0.0001
        %v1141 = vadd.f32 %v1139, 0.0001
        %v1142 = vadd.f32 %v806, %v966
        %v1143 = vadd.f32 %v807, %v967
        %v1144 = vadd.f32 %v1142, 0.0009
        %v1145 = vadd.f32 %v1143, 0.0009
        %v1146 = vmul.f32 %v1140, %v1144
        %v1147 = vmul.f32 %v1141, %v1145
        %v1148 = vrcp.pop %v1146
        %v1149 = vrcp.pop %v1147
        %v1150 = vmul.f32 %v1146, %v1148
        %v1151 = vmul.f32 %v1147, %v1149
        %v1152 = vsub.f32 2.0, %v1150
        %v1153 = vsub.f32 2.0, %v1151
        %v1154 = vmul.f32 %v1148, %v1152
        %v1155 = vmul.f32 %v1149, %v1153
        %v1156 = vmul.f32 %v1136, %v1154
        %v1157 = vmul.f32 %v1137, %v1155
        %v1158 = vld [vmem:[#allocation2] sm:$0xff]
        %v1159 = vsel %vm404, %v1156, 0.0
        %v1160 = vsel %vm404, %v1157, 0.0
        %v1161 = vadd.f32 %v1159, %v1160
        %1162 = vadd.xlane.f32.xlu0 %v1161
        %v1163 = vpop.xlane.xlu0 %1162
        %v1164 = vrot.slane %v1163, 4
        %v1165 = vadd.f32 %v1163, %v1164
        %v1166 = vrot.slane %v1165, 2
        %v1167 = vadd.f32 %v1165, %v1166
        %v1168 = vrot.slane %v1167, 1
        %v1169 = vadd.f32 %v1167, %v1168
        %s1170 = vtos %v1169
        %v1171 = vstv %s1170
        %v1172 = vadd.f32 %v1158, %v1171
        %1173 = vst [vmem:[#allocation2] sm:$0xff] %v1172
        // Predicated region
        $region57: #{tpu_custom_call.1} parent=35 // pred_check
          %p1174 = pneg %p303
        $region58: #{tpu_custom_call.1} parent=35 // pred_check_branch
          %1176 = sbr.rel (%p1174) target = $region60
        $region59: #{tpu_custom_call.1} parent=35 // pred_region
          %v1177 = vld [vmem:[#allocation2] sm:$0xff]
          %1178 = vst [vmem:[%s302] sm:$0xff] %v1177
        $region60: #{tpu_custom_call.1} parent=35 // pred_fallthru
          _
        %s1179 = sand.u32 %s143, 1
        %s1180 = scalar_lea.sflag [#allocation5], %s1179
        %s1181 = sand.u32 %s143, 1
        %s1182 = smul.addr %s1181, 8
        %s1183 = scalar_lea.vmem [#allocation11], %s1182
        // Predicated region
        $region61: #{tpu_custom_call.1} parent=35 // pred_check
          %p1184 = pneg %p153
        $region62: #{tpu_custom_call.1} parent=35 // pred_check_branch
          %1186 = sbr.rel (%p1184) target = $region64
        $region63: #{tpu_custom_call.1} parent=35 // pred_region
          %s1188 = ssub.s32 128, 128
          %1189 = vsyncadd %s1180, %s1188
          %s1190 = smul.addr %s29, 128
          %s1191 = scalar_lea.hbm %s4, %s1190
          %s1193 = sshll.u32 %s1183, 4
          %s1194 = int_to_ptr.vmem [resolvable:$true] %s1193
          %1196 = dma.vmem_to_hbm [thread:$0]  %s1194, 128, %s1191, %s1180
        $region64: #{tpu_custom_call.1} parent=35 // pred_fallthru
          _
      $region36: #{tpu_custom_call.1} parent=5 // pred_fallthru
        _
      %p1197 = scmp.le.s32.totalorder 2, %s20
      // Predicated region
      $region65: #{tpu_custom_call.1} parent=5 // pred_check
        %p1198 = pneg %p1197
      $region66: #{tpu_custom_call.1} parent=5 // pred_check_branch
        %1200 = sbr.rel (%p1198) target = $region68
      $region67: #{tpu_custom_call.1} parent=5 // pred_region
        %s1201 = ssub.s32 %s20, 2
        // Predicated region
        $region69: #{tpu_custom_call.1} parent=67 // pred_check
          %p1202 = pneg %p159
        $region70: #{tpu_custom_call.1} parent=67 // pred_check_branch
          %1204 = sbr.rel (%p1202) target = $region72
        $region71: #{tpu_custom_call.1} parent=67 // pred_region
          %s1205 = sand.u32 %s144, 1
          %s1206 = scalar_lea.sflag [#allocation5], %s1205
          %s1207 = sand.u32 %s144, 1
          %s1208 = smul.addr %s1207, 8
          %s1209 = scalar_lea.vmem [#allocation11], %s1208
          %1210 = dma.done %s1206, 128
        $region72: #{tpu_custom_call.1} parent=67 // pred_fallthru
          _
      $region68: #{tpu_custom_call.1} parent=5 // pred_fallthru
        _
    $region6: #{tpu_custom_call.1} parent=1 // loop_footer
      %s24 = sadd.s32 1, %s20
    $region7: #{tpu_custom_call.1} parent=1 // loop_footer_branch
      %19 = sbr.rel target = $region3
    $region8: #{tpu_custom_call.1} parent=1 // loop_exit
      _
    %1211 = vsyncpa [#allocation4], 1
    %s1212 = scalar_lea.sflag [#allocation4], 1
    %1213 = vsyncpa %s1212, 1
    %1214 = vsyncpa [#allocation7], 1
    %s1215 = scalar_lea.sflag [#allocation7], 1
    %1216 = vsyncpa %s1215, 1
    %1217 = vsyncpa [#allocation10], 1
    %1218 = vsyncpa [#allocation5], 1
    %s1219 = scalar_lea.sflag [#allocation5], 1
    %1220 = vsyncpa %s1219, 1

</llo_original>
